<compile_context>
chip_gen: v7x
topology: tpu7x:2x2x1
jax: 0.10.0
libtpu: 0.0.40
codegen_flags: <defaults>
</compile_context>

<pallas_src>
import functools

import jax
import jax.numpy as jnp
from jax.experimental import pallas as pl
from jax.experimental.pallas import tpu as pltpu

# ---- synthetic sizes standing in for AlfredSubgoal / segdef constants ------
NUM_TYPES = 12          # AlfredSubgoal.get_action_type_space_dim()
NUM_ARGS = 20           # segdef.get_num_objects() + 1
OUT_DIM = NUM_TYPES + NUM_ARGS
DMODEL = 32
LEAKY_SLOPE = 0.01      # nn.LeakyReLU() default negative_slope


def _leaky_relu(x):
    return jnp.where(x > 0, x, LEAKY_SLOPE * x)


def _round_up(x, m):
    return ((x + m - 1) // m) * m


OUT_PAD = _round_up(max(OUT_DIM, 128), 128)   # lane-dense output width


def action_predictor_kernel(
    state_ref, sent_ref, hist_ref,                       # (BM,D), (1|BM,D), (BM,D)
    wa_s_ref, wa_q_ref, wa_h_ref, ba_ref,                # linear_a split, (D,D)x3 + (1,D)
    wa1_ref, ba1_ref,                                    # linear_a1, (D,D) + (1,D)
    wa2a_ref, wa2b_ref, ba2_ref,                         # linear_a2 split, (D,D)x2 + (1,D)
    wb1_ref, wb2_ref, wb3_ref, bb_ref,                   # linear_b split, (D,OUT_PAD)x3 + (1,OUT_PAD)
    out_ref,                                             # (BM, OUT_PAD) log-probs (padded)
):
    f32 = jnp.float32
    state = state_ref[...]
    sent = sent_ref[...]          # (1, D) or (BM, D); broadcasts in the add
    hist = hist_ref[...]

    # linear_a(cat([state, sent, hist])) as split GEMMs -> no lane concat.
    x1 = _leaky_relu(
        jnp.dot(state, wa_s_ref[...], preferred_element_type=f32)
        + jnp.dot(sent, wa_q_ref[...], preferred_element_type=f32)
        + jnp.dot(hist, wa_h_ref[...], preferred_element_type=f32)
        + ba_ref[...])
    x2 = _leaky_relu(
        jnp.dot(x1, wa1_ref[...], preferred_element_type=f32) + ba1_ref[...])
    # linear_a2(cat([x1, x2])) as split GEMMs.
    x3 = _leaky_relu(
        jnp.dot(x1, wa2a_ref[...], preferred_element_type=f32)
        + jnp.dot(x2, wa2b_ref[...], preferred_element_type=f32)
        + ba2_ref[...])
    # linear_b(cat([x1, x2, x3])) as split GEMMs over a lane-dense (BM, OUT_PAD)
    # slab (weights/bias zero-padded host-side).
    logits = (jnp.dot(x1, wb1_ref[...], preferred_element_type=f32)
              + jnp.dot(x2, wb2_ref[...], preferred_element_type=f32)
              + jnp.dot(x3, wb3_ref[...], preferred_element_type=f32)
              + bb_ref[...])

    # Dual log-softmax over one lane-dense slab:
    #   columns [0, T)        -> softmax over action types
    #   columns [T, T + A)    -> softmax over arguments
    #   columns [T + A, PAD)  -> padding, ignored (sliced away on host)
    col = jax.lax.broadcasted_iota(jnp.int32, logits.shape, 1)
    is_type = col < NUM_TYPES
    is_arg = jnp.logical_and(col >= NUM_TYPES, col < OUT_DIM)
    neg = jnp.float32(-1e30)

    t_max = jnp.max(jnp.where(is_type, logits, neg), axis=-1, keepdims=True)
    a_max = jnp.max(jnp.where(is_arg, logits, neg), axis=-1, keepdims=True)
    t_sum = jnp.sum(jnp.exp(jnp.where(is_type, logits - t_max, neg)),
                    axis=-1, keepdims=True)
    a_sum = jnp.sum(jnp.exp(jnp.where(is_arg, logits - a_max, neg)),
                    axis=-1, keepdims=True)
    t_lognorm = t_max + jnp.log(t_sum)
    a_lognorm = a_max + jnp.log(a_sum)

    out_ref[...] = logits - jnp.where(is_type, t_lognorm, a_lognorm)


@functools.partial(jax.jit, static_argnames=("block_rows",))
def action_predictor_forward(state_emb, sentence_emb, action_hist_emb, params,
                             block_rows=512):
    """Mirrors ActionPredictor.forward (joint_prob=False)."""
    b, d = state_emb.shape

    # Row tile: multiple of 8 sublanes, capped at block_rows. Pad the batch so
    # the grid is exact (padded rows are garbage and sliced away below).
    bm = min(block_rows, _round_up(b, 8))
    padded_b = _round_up(b, bm)
    grid = (padded_b // bm,)

    def pad_rows(x):
        if x.shape[0] == padded_b:
            return x
        return jnp.pad(x, ((0, padded_b - x.shape[0]), (0, 0)))

    state_p = pad_rows(state_emb)
    hist_p = pad_rows(action_hist_emb)

    act_spec = pl.BlockSpec((bm, d), lambda i: (i, 0))

    if sentence_emb.shape[0] == 1:
        # torch repeat() equivalent handled in-kernel by broadcasting; the
        # (1, D) tensor stays resident instead of streaming B x D from HBM.
        sent_in = sentence_emb
        sent_spec = pl.BlockSpec((1, d), lambda i: (0, 0))
    else:
        sent_in = pad_rows(sentence_emb)
        sent_spec = act_spec

    # Host-side (free, static) splits of the concatenation-structured weights.
    wa, wa2, wb = params["wa"], params["wa2"], params["wb"]
    wa_s, wa_q, wa_h = wa[:d], wa[d:2 * d], wa[2 * d:]
    wa2a, wa2b = wa2[:d], wa2[d:]

    # Zero-pad linear_b to a lane-dense 128-multiple output width, then split.
    wb_pad = jnp.pad(wb, ((0, 0), (0, OUT_PAD - OUT_DIM)))
    bb_pad = jnp.pad(params["bb"], ((0, 0), (0, OUT_PAD - OUT_DIM)))
    wb1, wb2, wb3 = wb_pad[:d], wb_pad[d:2 * d], wb_pad[2 * d:]

    def const_spec(shape):
        return pl.BlockSpec(shape, lambda i: (0, 0))

    w_dd = const_spec((d, d))
    b_1d = const_spec((1, d))
    w_do = const_spec((d, OUT_PAD))
    b_1o = const_spec((1, OUT_PAD))

    n_streamed_acts = 2 if sentence_emb.shape[0] == 1 else 3
    flops = 2 * padded_b * (6 * d * d + 3 * d * OUT_PAD)
    bytes_accessed = (4 * padded_b * d * n_streamed_acts            # activations in
                      + 4 * (6 * d * d + 3 * d * OUT_PAD            # resident weights
                             + 3 * d + OUT_PAD)                     # biases
                      + 4 * padded_b * OUT_PAD)                     # output
    cost = pl.CostEstimate(flops=flops,
                           transcendentals=padded_b * (OUT_DIM + 2),
                           bytes_accessed=bytes_accessed)

    logprobs = pl.pallas_call(
        action_predictor_kernel,
        out_shape=jax.ShapeDtypeStruct((padded_b, OUT_PAD), jnp.float32),
        grid=grid,
        in_specs=[
            act_spec, sent_spec, act_spec,
            w_dd, w_dd, w_dd, b_1d,
            w_dd, b_1d,
            w_dd, w_dd, b_1d,
            w_do, w_do, w_do, b_1o,
        ],
        out_specs=pl.BlockSpec((bm, OUT_PAD), lambda i: (i, 0)),
        compiler_params=pltpu.CompilerParams(
            dimension_semantics=("parallel",)),
        cost_estimate=cost,
    )(
        state_p, sent_in, hist_p,
        wa_s, wa_q, wa_h, params["ba"],
        params["wa1"], params["ba1"],
        wa2a, wa2b, params["ba2"],
        wb1, wb2, wb3, bb_pad,
    )

    logprobs = logprobs[:b]
    return logprobs[:, :NUM_TYPES], logprobs[:, NUM_TYPES:OUT_DIM]


def init_params(key, dmodel):
    """Deterministic synthetic parameters (shapes match the module __init__)."""
    ks = jax.random.split(key, 8)

    def lin(kw, kb, fan_in, fan_out):
        bound = 1.0 / jnp.sqrt(jnp.float32(fan_in))
        w = jax.random.uniform(kw, (fan_in, fan_out), jnp.float32, -bound, bound)
        b = jax.random.uniform(kb, (1, fan_out), jnp.float32, -bound, bound)
        return w, b

    wa, ba = lin(ks[0], ks[1], dmodel * 3, dmodel)      # linear_a
    wa1, ba1 = lin(ks[2], ks[3], dmodel, dmodel)        # linear_a1
    wa2, ba2 = lin(ks[4], ks[5], dmodel * 2, dmodel)    # linear_a2
    wb, bb = lin(ks[6], ks[7], dmodel * 3, OUT_DIM)     # linear_b

    return dict(wa=wa, ba=ba, wa1=wa1, ba1=ba1, wa2=wa2, ba2=ba2, wb=wb, bb=bb)


def reference_forward(state_emb, sentence_emb, action_hist_emb, p):
    """Pure-JAX reference for correctness checking."""
    b = state_emb.shape[0]
    if sentence_emb.shape[0] == 1 and b > 1:
        sentence_emb = jnp.broadcast_to(sentence_emb, (b, sentence_emb.shape[1]))
    combined = jnp.concatenate([state_emb, sentence_emb, action_hist_emb], axis=1)
    x1 = jax.nn.leaky_relu(combined @ p["wa"] + p["ba"], LEAKY_SLOPE)
    x2 = jax.nn.leaky_relu(x1 @ p["wa1"] + p["ba1"], LEAKY_SLOPE)
    x3 = jax.nn.leaky_relu(jnp.concatenate([x1, x2], 1) @ p["wa2"] + p["ba2"],
                           LEAKY_SLOPE)
    x = jnp.concatenate([x1, x2, x3], 1) @ p["wb"] + p["bb"]
    return (jax.nn.log_softmax(x[:, :NUM_TYPES], axis=1),
            jax.nn.log_softmax(x[:, NUM_TYPES:], axis=1))


if __name__ == "__main__":
    key = jax.random.PRNGKey(0)
    k_state, k_sent, k_hist, k_param, k_s2, k_q2, k_h2 = jax.random.split(key, 7)

    params = init_params(k_param, DMODEL)

    # Case 1: batch-1 sentence that gets broadcast (torch .repeat path), B=2.
    B = 2
    state_emb = jax.random.normal(k_state, (B, DMODEL), jnp.float32)
    sentence_emb = jax.random.normal(k_sent, (1, DMODEL), jnp.float32)
    action_hist_emb = jax.random.normal(k_hist, (B, DMODEL), jnp.float32)

    type_lp, arg_lp = action_predictor_forward(
        state_emb, sentence_emb, action_hist_emb, params)
    jax.block_until_ready((type_lp, arg_lp))

    ref_type, ref_arg = reference_forward(
        state_emb, sentence_emb, action_hist_emb, params)
    assert type_lp.shape == (B, NUM_TYPES) and arg_lp.shape == (B, NUM_ARGS)
    assert jnp.allclose(type_lp, ref_type, atol=1e-5, rtol=1e-5)
    assert jnp.allclose(arg_lp, ref_arg, atol=1e-5, rtol=1e-5)

    # Case 2: fully batched sentence embeddings, B=16.
    B2 = 16
    state2 = jax.random.normal(k_s2, (B2, DMODEL), jnp.float32)
    sent2 = jax.random.normal(k_q2, (B2, DMODEL), jnp.float32)
    hist2 = jax.random.normal(k_h2, (B2, DMODEL), jnp.float32)

    type_lp2, arg_lp2 = action_predictor_forward(state2, sent2, hist2, params)
    jax.block_until_ready((type_lp2, arg_lp2))
    ref_type2, ref_arg2 = reference_forward(state2, sent2, hist2, params)
    assert jnp.allclose(type_lp2, ref_type2, atol=1e-5, rtol=1e-5)
    assert jnp.allclose(arg_lp2, ref_arg2, atol=1e-5, rtol=1e-5)

    print("KERNEL_OK")
</pallas_src>

<mosaic_0001>
module attributes {stable_mosaic.version = 11 : i64} {
  func.func @action_predictor_kernel(%arg0: i32, %arg1: memref<8x32xf32, #tpu.memory_space<vmem>>, %arg2: memref<1x32xf32, #tpu.memory_space<vmem>>, %arg3: memref<8x32xf32, #tpu.memory_space<vmem>>, %arg4: memref<32x32xf32, #tpu.memory_space<vmem>>, %arg5: memref<32x32xf32, #tpu.memory_space<vmem>>, %arg6: memref<32x32xf32, #tpu.memory_space<vmem>>, %arg7: memref<1x32xf32, #tpu.memory_space<vmem>>, %arg8: memref<32x32xf32, #tpu.memory_space<vmem>>, %arg9: memref<1x32xf32, #tpu.memory_space<vmem>>, %arg10: memref<32x32xf32, #tpu.memory_space<vmem>>, %arg11: memref<32x32xf32, #tpu.memory_space<vmem>>, %arg12: memref<1x32xf32, #tpu.memory_space<vmem>>, %arg13: memref<32x128xf32, #tpu.memory_space<vmem>>, %arg14: memref<32x128xf32, #tpu.memory_space<vmem>>, %arg15: memref<32x128xf32, #tpu.memory_space<vmem>>, %arg16: memref<1x128xf32, #tpu.memory_space<vmem>>, %arg17: memref<8x128xf32, #tpu.memory_space<vmem>>) attributes {dimension_semantics = [#tpu.dimension_semantics<parallel>], iteration_bounds = array<i64: 1>, scalar_prefetch = 0 : i64, scratch_operands = 0 : i64, tpu.core_type = #tpu.core_type<tc>, window_params = [{transform_indices = @transform_0, window_bounds = array<i64: 8, 32>}, {pipeline_mode = #tpu.pipeline_mode<synchronous>, transform_indices = @transform_1, window_bounds = array<i64: 1, 32>}, {transform_indices = @transform_2, window_bounds = array<i64: 8, 32>}, {pipeline_mode = #tpu.pipeline_mode<synchronous>, transform_indices = @transform_3, window_bounds = array<i64: 32, 32>}, {pipeline_mode = #tpu.pipeline_mode<synchronous>, transform_indices = @transform_4, window_bounds = array<i64: 32, 32>}, {pipeline_mode = #tpu.pipeline_mode<synchronous>, transform_indices = @transform_5, window_bounds = array<i64: 32, 32>}, {pipeline_mode = #tpu.pipeline_mode<synchronous>, transform_indices = @transform_6, window_bounds = array<i64: 1, 32>}, {pipeline_mode = #tpu.pipeline_mode<synchronous>, transform_indices = @transform_7, window_bounds = array<i64: 32, 32>}, {pipeline_mode = #tpu.pipeline_mode<synchronous>, transform_indices = @transform_8, window_bounds = array<i64: 1, 32>}, {pipeline_mode = #tpu.pipeline_mode<synchronous>, transform_indices = @transform_9, window_bounds = array<i64: 32, 32>}, {pipeline_mode = #tpu.pipeline_mode<synchronous>, transform_indices = @transform_10, window_bounds = array<i64: 32, 32>}, {pipeline_mode = #tpu.pipeline_mode<synchronous>, transform_indices = @transform_11, window_bounds = array<i64: 1, 32>}, {pipeline_mode = #tpu.pipeline_mode<synchronous>, transform_indices = @transform_12, window_bounds = array<i64: 32, 128>}, {pipeline_mode = #tpu.pipeline_mode<synchronous>, transform_indices = @transform_13, window_bounds = array<i64: 32, 128>}, {pipeline_mode = #tpu.pipeline_mode<synchronous>, transform_indices = @transform_14, window_bounds = array<i64: 32, 128>}, {pipeline_mode = #tpu.pipeline_mode<synchronous>, transform_indices = @transform_15, window_bounds = array<i64: 1, 128>}, {transform_indices = @transform_16, window_bounds = array<i64: 8, 128>}]} {
    %c0 = arith.constant 0 : index
    %c0_0 = arith.constant 0 : index
    %0 = vector.load %arg1[%c0, %c0_0] : memref<8x32xf32, #tpu.memory_space<vmem>>, vector<8x32xf32>
    %c0_1 = arith.constant 0 : index
    %c0_2 = arith.constant 0 : index
    %1 = vector.load %arg2[%c0_1, %c0_2] : memref<1x32xf32, #tpu.memory_space<vmem>>, vector<1x32xf32>
    %c0_3 = arith.constant 0 : index
    %c0_4 = arith.constant 0 : index
    %2 = vector.load %arg3[%c0_3, %c0_4] : memref<8x32xf32, #tpu.memory_space<vmem>>, vector<8x32xf32>
    %c0_5 = arith.constant 0 : index
    %c0_6 = arith.constant 0 : index
    %3 = vector.load %arg4[%c0_5, %c0_6] : memref<32x32xf32, #tpu.memory_space<vmem>>, vector<32x32xf32>
    %cst = arith.constant dense<0.000000e+00> : vector<8x32xf32>
    %4 = tpu.matmul %0, %3, %cst {dimension_numbers = #tpu.dot_dimension_numbers<[1], [0], [0], [1], [0, 0, 1, 1], [], []>} : vector<8x32xf32>, vector<32x32xf32>, vector<8x32xf32> -> vector<8x32xf32>
    %c0_7 = arith.constant 0 : index
    %c0_8 = arith.constant 0 : index
    %5 = vector.load %arg5[%c0_7, %c0_8] : memref<32x32xf32, #tpu.memory_space<vmem>>, vector<32x32xf32>
    %cst_9 = arith.constant dense<0.000000e+00> : vector<1x32xf32>
    %6 = tpu.matmul %1, %5, %cst_9 {dimension_numbers = #tpu.dot_dimension_numbers<[1], [0], [0], [1], [0, 0, 1, 1], [], []>} : vector<1x32xf32>, vector<32x32xf32>, vector<1x32xf32> -> vector<1x32xf32>
    %7 = vector.broadcast %6 : vector<1x32xf32> to vector<8x32xf32>
    %8 = arith.addf %4, %7 : vector<8x32xf32>
    %c0_10 = arith.constant 0 : index
    %c0_11 = arith.constant 0 : index
    %9 = vector.load %arg6[%c0_10, %c0_11] : memref<32x32xf32, #tpu.memory_space<vmem>>, vector<32x32xf32>
    %cst_12 = arith.constant dense<0.000000e+00> : vector<8x32xf32>
    %10 = tpu.matmul %2, %9, %cst_12 {dimension_numbers = #tpu.dot_dimension_numbers<[1], [0], [0], [1], [0, 0, 1, 1], [], []>} : vector<8x32xf32>, vector<32x32xf32>, vector<8x32xf32> -> vector<8x32xf32>
    %11 = arith.addf %8, %10 : vector<8x32xf32>
    %c0_13 = arith.constant 0 : index
    %c0_14 = arith.constant 0 : index
    %12 = vector.load %arg7[%c0_13, %c0_14] : memref<1x32xf32, #tpu.memory_space<vmem>>, vector<1x32xf32>
    %13 = vector.broadcast %12 : vector<1x32xf32> to vector<8x32xf32>
    %14 = arith.addf %11, %13 : vector<8x32xf32>
    %cst_15 = arith.constant 0.000000e+00 : f32
    %15 = vector.broadcast %cst_15 : f32 to vector<8x32xf32>
    %16 = arith.cmpf ogt, %14, %15 : vector<8x32xf32>
    %cst_16 = arith.constant 0.00999999977 : f32
    %17 = vector.broadcast %cst_16 : f32 to vector<8x32xf32>
    %18 = arith.mulf %17, %14 : vector<8x32xf32>
    %19 = arith.select %16, %14, %18 : vector<8x32xi1>, vector<8x32xf32>
    %c0_17 = arith.constant 0 : index
    %c0_18 = arith.constant 0 : index
    %20 = vector.load %arg8[%c0_17, %c0_18] : memref<32x32xf32, #tpu.memory_space<vmem>>, vector<32x32xf32>
    %cst_19 = arith.constant dense<0.000000e+00> : vector<8x32xf32>
    %21 = tpu.matmul %19, %20, %cst_19 {dimension_numbers = #tpu.dot_dimension_numbers<[1], [0], [0], [1], [0, 0, 1, 1], [], []>} : vector<8x32xf32>, vector<32x32xf32>, vector<8x32xf32> -> vector<8x32xf32>
    %c0_20 = arith.constant 0 : index
    %c0_21 = arith.constant 0 : index
    %22 = vector.load %arg9[%c0_20, %c0_21] : memref<1x32xf32, #tpu.memory_space<vmem>>, vector<1x32xf32>
    %23 = vector.broadcast %22 : vector<1x32xf32> to vector<8x32xf32>
    %24 = arith.addf %21, %23 : vector<8x32xf32>
    %cst_22 = arith.constant 0.000000e+00 : f32
    %25 = vector.broadcast %cst_22 : f32 to vector<8x32xf32>
    %26 = arith.cmpf ogt, %24, %25 : vector<8x32xf32>
    %cst_23 = arith.constant 0.00999999977 : f32
    %27 = vector.broadcast %cst_23 : f32 to vector<8x32xf32>
    %28 = arith.mulf %27, %24 : vector<8x32xf32>
    %29 = arith.select %26, %24, %28 : vector<8x32xi1>, vector<8x32xf32>
    %c0_24 = arith.constant 0 : index
    %c0_25 = arith.constant 0 : index
    %30 = vector.load %arg10[%c0_24, %c0_25] : memref<32x32xf32, #tpu.memory_space<vmem>>, vector<32x32xf32>
    %cst_26 = arith.constant dense<0.000000e+00> : vector<8x32xf32>
    %31 = tpu.matmul %19, %30, %cst_26 {dimension_numbers = #tpu.dot_dimension_numbers<[1], [0], [0], [1], [0, 0, 1, 1], [], []>} : vector<8x32xf32>, vector<32x32xf32>, vector<8x32xf32> -> vector<8x32xf32>
    %c0_27 = arith.constant 0 : index
    %c0_28 = arith.constant 0 : index
    %32 = vector.load %arg11[%c0_27, %c0_28] : memref<32x32xf32, #tpu.memory_space<vmem>>, vector<32x32xf32>
    %cst_29 = arith.constant dense<0.000000e+00> : vector<8x32xf32>
    %33 = tpu.matmul %29, %32, %cst_29 {dimension_numbers = #tpu.dot_dimension_numbers<[1], [0], [0], [1], [0, 0, 1, 1], [], []>} : vector<8x32xf32>, vector<32x32xf32>, vector<8x32xf32> -> vector<8x32xf32>
    %34 = arith.addf %31, %33 : vector<8x32xf32>
    %c0_30 = arith.constant 0 : index
    %c0_31 = arith.constant 0 : index
    %35 = vector.load %arg12[%c0_30, %c0_31] : memref<1x32xf32, #tpu.memory_space<vmem>>, vector<1x32xf32>
    %36 = vector.broadcast %35 : vector<1x32xf32> to vector<8x32xf32>
    %37 = arith.addf %34, %36 : vector<8x32xf32>
    %cst_32 = arith.constant 0.000000e+00 : f32
    %38 = vector.broadcast %cst_32 : f32 to vector<8x32xf32>
    %39 = arith.cmpf ogt, %37, %38 : vector<8x32xf32>
    %cst_33 = arith.constant 0.00999999977 : f32
    %40 = vector.broadcast %cst_33 : f32 to vector<8x32xf32>
    %41 = arith.mulf %40, %37 : vector<8x32xf32>
    %42 = arith.select %39, %37, %41 : vector<8x32xi1>, vector<8x32xf32>
    %c0_34 = arith.constant 0 : index
    %c0_35 = arith.constant 0 : index
    %43 = vector.load %arg13[%c0_34, %c0_35] : memref<32x128xf32, #tpu.memory_space<vmem>>, vector<32x128xf32>
    %cst_36 = arith.constant dense<0.000000e+00> : vector<8x128xf32>
    %44 = tpu.matmul %19, %43, %cst_36 {dimension_numbers = #tpu.dot_dimension_numbers<[1], [0], [0], [1], [0, 0, 1, 1], [], []>} : vector<8x32xf32>, vector<32x128xf32>, vector<8x128xf32> -> vector<8x128xf32>
    %c0_37 = arith.constant 0 : index
    %c0_38 = arith.constant 0 : index
    %45 = vector.load %arg14[%c0_37, %c0_38] : memref<32x128xf32, #tpu.memory_space<vmem>>, vector<32x128xf32>
    %cst_39 = arith.constant dense<0.000000e+00> : vector<8x128xf32>
    %46 = tpu.matmul %29, %45, %cst_39 {dimension_numbers = #tpu.dot_dimension_numbers<[1], [0], [0], [1], [0, 0, 1, 1], [], []>} : vector<8x32xf32>, vector<32x128xf32>, vector<8x128xf32> -> vector<8x128xf32>
    %47 = arith.addf %44, %46 : vector<8x128xf32>
    %c0_40 = arith.constant 0 : index
    %c0_41 = arith.constant 0 : index
    %48 = vector.load %arg15[%c0_40, %c0_41] : memref<32x128xf32, #tpu.memory_space<vmem>>, vector<32x128xf32>
    %cst_42 = arith.constant dense<0.000000e+00> : vector<8x128xf32>
    %49 = tpu.matmul %42, %48, %cst_42 {dimension_numbers = #tpu.dot_dimension_numbers<[1], [0], [0], [1], [0, 0, 1, 1], [], []>} : vector<8x32xf32>, vector<32x128xf32>, vector<8x128xf32> -> vector<8x128xf32>
    %50 = arith.addf %47, %49 : vector<8x128xf32>
    %c0_43 = arith.constant 0 : index
    %c0_44 = arith.constant 0 : index
    %51 = vector.load %arg16[%c0_43, %c0_44] : memref<1x128xf32, #tpu.memory_space<vmem>>, vector<1x128xf32>
    %52 = vector.broadcast %51 : vector<1x128xf32> to vector<8x128xf32>
    %53 = arith.addf %50, %52 : vector<8x128xf32>
    %54 = tpu.iota {dimensions = array<i32: 1>} : vector<8x128xi32>
    %c12_i32 = arith.constant 12 : i32
    %55 = vector.broadcast %c12_i32 : i32 to vector<8x128xi32>
    %56 = arith.cmpi slt, %54, %55 : vector<8x128xi32>
    %c12_i32_45 = arith.constant 12 : i32
    %57 = vector.broadcast %c12_i32_45 : i32 to vector<8x128xi32>
    %58 = arith.cmpi sge, %54, %57 : vector<8x128xi32>
    %c32_i32 = arith.constant 32 : i32
    %59 = vector.broadcast %c32_i32 : i32 to vector<8x128xi32>
    %60 = arith.cmpi slt, %54, %59 : vector<8x128xi32>
    %61 = arith.andi %58, %60 : vector<8x128xi1>
    %cst_46 = arith.constant -1.000000e+30 : f32
    %62 = vector.broadcast %cst_46 : f32 to vector<8x128xf32>
    %63 = arith.select %56, %53, %62 : vector<8x128xi1>, vector<8x128xf32>
    %cst_47 = arith.constant dense<0xFF800000> : vector<8xf32>
    %64 = vector.multi_reduction <maximumf>, %63, %cst_47 [1] : vector<8x128xf32> to vector<8xf32>
    %65 = vector.shape_cast %64 : vector<8xf32> to vector<8x1xf32>
    %cst_48 = arith.constant -1.000000e+30 : f32
    %66 = vector.broadcast %cst_48 : f32 to vector<8x128xf32>
    %67 = arith.select %61, %53, %66 : vector<8x128xi1>, vector<8x128xf32>
    %cst_49 = arith.constant dense<0xFF800000> : vector<8xf32>
    %68 = vector.multi_reduction <maximumf>, %67, %cst_49 [1] : vector<8x128xf32> to vector<8xf32>
    %69 = vector.shape_cast %68 : vector<8xf32> to vector<8x1xf32>
    %70 = vector.broadcast %65 : vector<8x1xf32> to vector<8x128xf32>
    %71 = arith.subf %53, %70 : vector<8x128xf32>
    %cst_50 = arith.constant -1.000000e+30 : f32
    %72 = vector.broadcast %cst_50 : f32 to vector<8x128xf32>
    %73 = arith.select %56, %71, %72 : vector<8x128xi1>, vector<8x128xf32>
    %74 = math.exp %73 : vector<8x128xf32>
    %cst_51 = arith.constant dense<0.000000e+00> : vector<8xf32>
    %75 = vector.multi_reduction <add>, %74, %cst_51 [1] : vector<8x128xf32> to vector<8xf32>
    %76 = vector.shape_cast %75 : vector<8xf32> to vector<8x1xf32>
    %77 = vector.broadcast %69 : vector<8x1xf32> to vector<8x128xf32>
    %78 = arith.subf %53, %77 : vector<8x128xf32>
    %cst_52 = arith.constant -1.000000e+30 : f32
    %79 = vector.broadcast %cst_52 : f32 to vector<8x128xf32>
    %80 = arith.select %61, %78, %79 : vector<8x128xi1>, vector<8x128xf32>
    %81 = math.exp %80 : vector<8x128xf32>
    %cst_53 = arith.constant dense<0.000000e+00> : vector<8xf32>
    %82 = vector.multi_reduction <add>, %81, %cst_53 [1] : vector<8x128xf32> to vector<8xf32>
    %83 = vector.shape_cast %82 : vector<8xf32> to vector<8x1xf32>
    %84 = math.log %76 : vector<8x1xf32>
    %85 = arith.addf %65, %84 : vector<8x1xf32>
    %86 = math.log %83 : vector<8x1xf32>
    %87 = arith.addf %69, %86 : vector<8x1xf32>
    %88 = vector.shape_cast %85 : vector<8x1xf32> to vector<8x1xf32>
    %89 = vector.broadcast %88 : vector<8x1xf32> to vector<8x128xf32>
    %90 = vector.shape_cast %87 : vector<8x1xf32> to vector<8x1xf32>
    %91 = vector.broadcast %90 : vector<8x1xf32> to vector<8x128xf32>
    %92 = arith.select %56, %89, %91 : vector<8x128xi1>, vector<8x128xf32>
    %93 = arith.subf %53, %92 : vector<8x128xf32>
    %c0_54 = arith.constant 0 : index
    %c0_55 = arith.constant 0 : index
    %94 = vector.load %arg17[%c0_54, %c0_55] : memref<8x128xf32, #tpu.memory_space<vmem>>, vector<8x128xf32>
    tpu.vector_store %arg17[%c0_54, %c0_55], %93 {strides = array<i32>} : memref<8x128xf32, #tpu.memory_space<vmem>>, vector<8x128xf32>,
    return
  }
  func.func @transform_0(%arg0: i32) -> (i32, i32) {
    %c0_i32 = arith.constant 0 : i32
    %c0_i32_0 = arith.constant 0 : i32
    return %arg0, %c0_i32 : i32, i32
  }
  func.func @transform_1(%arg0: i32) -> (i32, i32) {
    %c0_i32 = arith.constant 0 : i32
    %c0_i32_0 = arith.constant 0 : i32
    %c0_i32_1 = arith.constant 0 : i32
    return %c0_i32, %c0_i32_0 : i32, i32
  }
  func.func @transform_2(%arg0: i32) -> (i32, i32) {
    %c0_i32 = arith.constant 0 : i32
    %c0_i32_0 = arith.constant 0 : i32
    return %arg0, %c0_i32 : i32, i32
  }
  func.func @transform_3(%arg0: i32) -> (i32, i32) {
    %c0_i32 = arith.constant 0 : i32
    %c0_i32_0 = arith.constant 0 : i32
    %c0_i32_1 = arith.constant 0 : i32
    return %c0_i32, %c0_i32_0 : i32, i32
  }
  func.func @transform_4(%arg0: i32) -> (i32, i32) {
    %c0_i32 = arith.constant 0 : i32
    %c0_i32_0 = arith.constant 0 : i32
    %c0_i32_1 = arith.constant 0 : i32
    return %c0_i32, %c0_i32_0 : i32, i32
  }
  func.func @transform_5(%arg0: i32) -> (i32, i32) {
    %c0_i32 = arith.constant 0 : i32
    %c0_i32_0 = arith.constant 0 : i32
    %c0_i32_1 = arith.constant 0 : i32
    return %c0_i32, %c0_i32_0 : i32, i32
  }
  func.func @transform_6(%arg0: i32) -> (i32, i32) {
    %c0_i32 = arith.constant 0 : i32
    %c0_i32_0 = arith.constant 0 : i32
    %c0_i32_1 = arith.constant 0 : i32
    return %c0_i32, %c0_i32_0 : i32, i32
  }
  func.func @transform_7(%arg0: i32) -> (i32, i32) {
    %c0_i32 = arith.constant 0 : i32
    %c0_i32_0 = arith.constant 0 : i32
    %c0_i32_1 = arith.constant 0 : i32
    return %c0_i32, %c0_i32_0 : i32, i32
  }
  func.func @transform_8(%arg0: i32) -> (i32, i32) {
    %c0_i32 = arith.constant 0 : i32
    %c0_i32_0 = arith.constant 0 : i32
    %c0_i32_1 = arith.constant 0 : i32
    return %c0_i32, %c0_i32_0 : i32, i32
  }
  func.func @transform_9(%arg0: i32) -> (i32, i32) {
    %c0_i32 = arith.constant 0 : i32
    %c0_i32_0 = arith.constant 0 : i32
    %c0_i32_1 = arith.constant 0 : i32
    return %c0_i32, %c0_i32_0 : i32, i32
  }
  func.func @transform_10(%arg0: i32) -> (i32, i32) {
    %c0_i32 = arith.constant 0 : i32
    %c0_i32_0 = arith.constant 0 : i32
    %c0_i32_1 = arith.constant 0 : i32
    return %c0_i32, %c0_i32_0 : i32, i32
  }
  func.func @transform_11(%arg0: i32) -> (i32, i32) {
    %c0_i32 = arith.constant 0 : i32
    %c0_i32_0 = arith.constant 0 : i32
    %c0_i32_1 = arith.constant 0 : i32
    return %c0_i32, %c0_i32_0 : i32, i32
  }
  func.func @transform_12(%arg0: i32) -> (i32, i32) {
    %c0_i32 = arith.constant 0 : i32
    %c0_i32_0 = arith.constant 0 : i32
    %c0_i32_1 = arith.constant 0 : i32
    return %c0_i32, %c0_i32_0 : i32, i32
  }
  func.func @transform_13(%arg0: i32) -> (i32, i32) {
    %c0_i32 = arith.constant 0 : i32
    %c0_i32_0 = arith.constant 0 : i32
    %c0_i32_1 = arith.constant 0 : i32
    return %c0_i32, %c0_i32_0 : i32, i32
  }
  func.func @transform_14(%arg0: i32) -> (i32, i32) {
    %c0_i32 = arith.constant 0 : i32
    %c0_i32_0 = arith.constant 0 : i32
    %c0_i32_1 = arith.constant 0 : i32
    return %c0_i32, %c0_i32_0 : i32, i32
  }
  func.func @transform_15(%arg0: i32) -> (i32, i32) {
    %c0_i32 = arith.constant 0 : i32
    %c0_i32_0 = arith.constant 0 : i32
    %c0_i32_1 = arith.constant 0 : i32
    return %c0_i32, %c0_i32_0 : i32, i32
  }
  func.func @transform_16(%arg0: i32) -> (i32, i32) {
    %c0_i32 = arith.constant 0 : i32
    %c0_i32_0 = arith.constant 0 : i32
    return %arg0, %c0_i32 : i32, i32
  }
}

</mosaic_0001>

<llo_original>
// kernel: action_predictor_forward.1
$region0: #{action_predictor_forward.1}
  #allocation0 [shape = 'u32[]', space=smem, size = 0x4, offset = 0x4, fixed_abs, tag = 'smem constant byte address 0x4 - core index']
  #allocation1 [shape = 'u32[144,128]{1,0:T(1,128)}', space=vmem, size = 0x12000, scoped, tag = 'internal scratch']
  %s0 = inlined_call_operand.vmem [shape: f32[8,32], index: 0, kind: input, shape index: {}]
  %s1 = inlined_call_operand.vmem [shape: f32[1,32], index: 1, kind: input, shape index: {}]
  %s2 = inlined_call_operand.vmem [shape: f32[8,32], index: 2, kind: input, shape index: {}]
  %s3 = inlined_call_operand.vmem [shape: f32[32,32], index: 3, kind: input, shape index: {}]
  %s4 = inlined_call_operand.vmem [shape: f32[32,32], index: 4, kind: input, shape index: {}]
  %s5 = inlined_call_operand.vmem [shape: f32[32,32], index: 5, kind: input, shape index: {}]
  %s6 = inlined_call_operand.vmem [shape: f32[1,32], index: 6, kind: input, shape index: {}]
  %s7 = inlined_call_operand.vmem [shape: f32[32,32], index: 7, kind: input, shape index: {}]
  %s8 = inlined_call_operand.vmem [shape: f32[1,32], index: 8, kind: input, shape index: {}]
  %s9 = inlined_call_operand.vmem [shape: f32[32,32], index: 9, kind: input, shape index: {}]
  %s10 = inlined_call_operand.vmem [shape: f32[32,32], index: 10, kind: input, shape index: {}]
  %s11 = inlined_call_operand.vmem [shape: f32[1,32], index: 11, kind: input, shape index: {}]
  %s12 = inlined_call_operand.vmem [shape: f32[32,128], index: 12, kind: input, shape index: {}]
  %s13 = inlined_call_operand.vmem [shape: f32[32,128], index: 13, kind: input, shape index: {}]
  %s14 = inlined_call_operand.vmem [shape: f32[32,128], index: 14, kind: input, shape index: {}]
  %s15 = inlined_call_operand.vmem [shape: f32[1,128], index: 15, kind: input, shape index: {}]
  %s16 = inlined_call_operand.vmem [shape: f32[8,128], index: 16, kind: output, shape index: {}]
  %s17 = sld [smem:[#allocation0]]
  $region74: #{action_predictor_forward.1} parent=0
    _
  %s19 = ssub.s32 1, %s17
  %s20 = scalar_select 0, %s19, %s17
  // Predicated region
  $region2: #{action_predictor_forward.1} parent=0 // pred_check
    _
  $region3: #{action_predictor_forward.1} parent=0 // pred_check_branch
    %22 = sbr.rel (0) target = $region5
  $region4: #{action_predictor_forward.1} parent=0 // pred_region
    _
  $region5: #{action_predictor_forward.1} parent=0 // pred_fallthru
    _
  // Predicated region
  $region6: #{action_predictor_forward.1} parent=0 // pred_check
    _
  $region7: #{action_predictor_forward.1} parent=0 // pred_check_branch
    %24 = sbr.rel (0) target = $region9
  $region8: #{action_predictor_forward.1} parent=0 // pred_region
    _
  $region9: #{action_predictor_forward.1} parent=0 // pred_fallthru
    _
  // Predicated region
  $region10: #{action_predictor_forward.1} parent=0 // pred_check
    _
  $region11: #{action_predictor_forward.1} parent=0 // pred_check_branch
    %26 = sbr.rel (0) target = $region13
  $region12: #{action_predictor_forward.1} parent=0 // pred_region
    _
  $region13: #{action_predictor_forward.1} parent=0 // pred_fallthru
    _
  // Predicated region
  $region14: #{action_predictor_forward.1} parent=0 // pred_check
    _
  $region15: #{action_predictor_forward.1} parent=0 // pred_check_branch
    %28 = sbr.rel (0) target = $region17
  $region16: #{action_predictor_forward.1} parent=0 // pred_region
    _
  $region17: #{action_predictor_forward.1} parent=0 // pred_fallthru
    _
  // Predicated region
  $region18: #{action_predictor_forward.1} parent=0 // pred_check
    _
  $region19: #{action_predictor_forward.1} parent=0 // pred_check_branch
    %30 = sbr.rel (0) target = $region21
  $region20: #{action_predictor_forward.1} parent=0 // pred_region
    _
  $region21: #{action_predictor_forward.1} parent=0 // pred_fallthru
    _
  // Predicated region
  $region22: #{action_predictor_forward.1} parent=0 // pred_check
    _
  $region23: #{action_predictor_forward.1} parent=0 // pred_check_branch
    %32 = sbr.rel (0) target = $region25
  $region24: #{action_predictor_forward.1} parent=0 // pred_region
    _
  $region25: #{action_predictor_forward.1} parent=0 // pred_fallthru
    _
  // Predicated region
  $region26: #{action_predictor_forward.1} parent=0 // pred_check
    _
  $region27: #{action_predictor_forward.1} parent=0 // pred_check_branch
    %34 = sbr.rel (0) target = $region29
  $region28: #{action_predictor_forward.1} parent=0 // pred_region
    _
  $region29: #{action_predictor_forward.1} parent=0 // pred_fallthru
    _
  // Predicated region
  $region30: #{action_predictor_forward.1} parent=0 // pred_check
    _
  $region31: #{action_predictor_forward.1} parent=0 // pred_check_branch
    %36 = sbr.rel (0) target = $region33
  $region32: #{action_predictor_forward.1} parent=0 // pred_region
    _
  $region33: #{action_predictor_forward.1} parent=0 // pred_fallthru
    _
  // Predicated region
  $region34: #{action_predictor_forward.1} parent=0 // pred_check
    _
  $region35: #{action_predictor_forward.1} parent=0 // pred_check_branch
    %38 = sbr.rel (0) target = $region37
  $region36: #{action_predictor_forward.1} parent=0 // pred_region
    _
  $region37: #{action_predictor_forward.1} parent=0 // pred_fallthru
    _
  // Predicated region
  $region38: #{action_predictor_forward.1} parent=0 // pred_check
    _
  $region39: #{action_predictor_forward.1} parent=0 // pred_check_branch
    %40 = sbr.rel (0) target = $region41
  $region40: #{action_predictor_forward.1} parent=0 // pred_region
    _
  $region41: #{action_predictor_forward.1} parent=0 // pred_fallthru
    _
  // Predicated region
  $region42: #{action_predictor_forward.1} parent=0 // pred_check
    _
  $region43: #{action_predictor_forward.1} parent=0 // pred_check_branch
    %42 = sbr.rel (0) target = $region45
  $region44: #{action_predictor_forward.1} parent=0 // pred_region
    _
  $region45: #{action_predictor_forward.1} parent=0 // pred_fallthru
    _
  // Predicated region
  $region46: #{action_predictor_forward.1} parent=0 // pred_check
    _
  $region47: #{action_predictor_forward.1} parent=0 // pred_check_branch
    %44 = sbr.rel (0) target = $region49
  $region48: #{action_predictor_forward.1} parent=0 // pred_region
    _
  $region49: #{action_predictor_forward.1} parent=0 // pred_fallthru
    _
  // Predicated region
  $region50: #{action_predictor_forward.1} parent=0 // pred_check
    _
  $region51: #{action_predictor_forward.1} parent=0 // pred_check_branch
    %46 = sbr.rel (0) target = $region53
  $region52: #{action_predictor_forward.1} parent=0 // pred_region
    _
  $region53: #{action_predictor_forward.1} parent=0 // pred_fallthru
    _
  // Predicated region
  $region54: #{action_predictor_forward.1} parent=0 // pred_check
    _
  $region55: #{action_predictor_forward.1} parent=0 // pred_check_branch
    %48 = sbr.rel (0) target = $region57
  $region56: #{action_predictor_forward.1} parent=0 // pred_region
    _
  $region57: #{action_predictor_forward.1} parent=0 // pred_fallthru
    _
  // Predicated region
  $region58: #{action_predictor_forward.1} parent=0 // pred_check
    _
  $region59: #{action_predictor_forward.1} parent=0 // pred_check_branch
    %50 = sbr.rel (0) target = $region61
  $region60: #{action_predictor_forward.1} parent=0 // pred_region
    _
  $region61: #{action_predictor_forward.1} parent=0 // pred_fallthru
    _
  // Predicated region
  $region62: #{action_predictor_forward.1} parent=0 // pred_check
    _
  $region63: #{action_predictor_forward.1} parent=0 // pred_check_branch
    %52 = sbr.rel (0) target = $region65
  $region64: #{action_predictor_forward.1} parent=0 // pred_region
    _
  $region65: #{action_predictor_forward.1} parent=0 // pred_fallthru
    _
  %v53 = vld [vmem:[%s0] sm:$0xff]
  %v54 = vld [vmem:[%s1] sm:$0x1]
  %v55 = vld [vmem:[%s2] sm:$0xff]
  %v56 = vld [vmem:[%s3] sm:$0xff]
  %v57 = vld [vmem:[%s3 + $0x8] sm:$0xff]
  %v58 = vld [vmem:[%s3 + $0x10] sm:$0xff]
  %v59 = vld [vmem:[%s3 + $0x18] sm:$0xff]
  %v60 = vld [vmem:[%s4] sm:$0xff]
  %v61 = vld [vmem:[%s4 + $0x8] sm:$0xff]
  %v62 = vld [vmem:[%s4 + $0x10] sm:$0xff]
  %v63 = vld [vmem:[%s4 + $0x18] sm:$0xff]
  %vm64 = vcmask 261120
  %v66 = vsel %vm64, %v54, 0
  %68 = vmatprep.subr.mxu0 0.0
  %69 = vmatpush1.msra.mxu0 %v60
  %70 = vmatprep.subr.mxu0 0.0
  %71 = vmatpush1.msra.mxu0 %v61
  %72 = vmatprep.subr.mxu0 0.0
  %73 = vmatpush1.msra.mxu0 %v62
  %74 = vmatprep.subr.mxu0 0.0
  %75 = vmatpush1.msra.mxu0 %v63
  %76 = vmatprep.subr.mxu0 0.0
  %77 = vmatpush1.msra.mxu0 0.0
  %78 = vmatprep.subr.mxu0 0.0
  %79 = vmatpush1.msra.mxu0 0.0
  %80 = vmatprep.subr.mxu0 0.0
  %81 = vmatpush1.msra.mxu0 0.0
  %82 = vmatprep.subr.mxu0 0.0
  %83 = vmatpush1.msra.mxu0 0.0
  %84 = vmatprep.subr.mxu0 0.0
  %85 = vmatpush1.msra.mxu0 0.0
  %86 = vmatprep.subr.mxu0 0.0
  %87 = vmatpush1.msra.mxu0 0.0
  %88 = vmatprep.subr.mxu0 0.0
  %89 = vmatpush1.msra.mxu0 0.0
  %90 = vmatprep.subr.mxu0 0.0
  %91 = vmatpush1.msra.mxu0 0.0
  %92 = vmatprep.subr.mxu0 0.0
  %93 = vmatpush1.msra.mxu0 0.0
  %94 = vmatprep.subr.mxu0 0.0
  %95 = vmatpush1.msra.mxu0 0.0
  %96 = vmatprep.subr.mxu0 0.0
  %97 = vmatpush1.msra.mxu0 0.0
  %98 = vmatprep.subr.mxu0 0.0
  %99 = vmatpush1.msra.mxu0 0.0
  %100 = vmatprep.subr.mxu0 0.0
  %101 = vmatpush1.msra.mxu0 0.0
  %102 = vmatprep.subr.mxu0 0.0
  %103 = vmatpush1.msra.mxu0 0.0
  %104 = vmatprep.subr.mxu0 0.0
  %105 = vmatpush1.msra.mxu0 0.0
  %106 = vmatprep.subr.mxu0 0.0
  %107 = vmatpush1.msra.mxu0 0.0
  %108 = vmatprep.subr.mxu0 0.0
  %109 = vmatpush1.msra.mxu0 0.0
  %110 = vmatprep.subr.mxu0 0.0
  %111 = vmatpush1.msra.mxu0 0.0
  %112 = vmatprep.subr.mxu0 0.0
  %113 = vmatpush1.msra.mxu0 0.0
  %114 = vmatprep.subr.mxu0 0.0
  %115 = vmatpush1.msra.mxu0 0.0
  %116 = vmatprep.subr.mxu0 0.0
  %117 = vmatpush1.msra.mxu0 0.0
  %118 = vmatprep.subr.mxu0 0.0
  %119 = vmatpush1.msra.mxu0 0.0
  %120 = vmatprep.subr.mxu0 0.0
  %121 = vmatpush1.msra.mxu0 0.0
  %122 = vmatprep.subr.mxu0 0.0
  %123 = vmatpush1.msra.mxu0 0.0
  %124 = vmatprep.subr.mxu0 0.0
  %125 = vmatpush1.msra.mxu0 0.0
  %126 = vmatprep.subr.mxu0 0.0
  %127 = vmatpush1.msra.mxu0 0.0
  %128 = vmatprep.subr.mxu0 0.0
  %129 = vmatpush1.msra.mxu0 0.0
  %130 = vmatprep.subr.mxu0 0.0
  %131 = vmatpush1.msra.mxu0 0.0
  %132 = vmatprep.mubr.f32.mxu0 0.0
  %133 = vmatmul.mubr.f32.gmra.mrb[0].mxu0 %v66
  %v134 = vpop.f32.mrb[0].mxu0
  %v135 = vadd.f32 0.0, %v134
  %v136 = vpop.f32.mrb[0].mxu0
  %137 = vdwg.mxu0
  %v138 = vlaneseq
  %v139 = vshrl.u32 %v138, 7
  %v140 = vsub.s32 0, %v139
  %v141 = vrot.slane %v135, %v140
  %v143 = vsel %vm64, %v53, 0
  %145 = vmatprep.subr.mxu0 0.0
  %146 = vmatpush1.msra.mxu0 %v56
  %147 = vmatprep.subr.mxu0 0.0
  %148 = vmatpush1.msra.mxu0 %v57
  %149 = vmatprep.subr.mxu0 0.0
  %150 = vmatpush1.msra.mxu0 %v58
  %151 = vmatprep.subr.mxu0 0.0
  %152 = vmatpush1.msra.mxu0 %v59
  %153 = vmatprep.subr.mxu0 0.0
  %154 = vmatpush1.msra.mxu0 0.0
  %155 = vmatprep.subr.mxu0 0.0
  %156 = vmatpush1.msra.mxu0 0.0
  %157 = vmatprep.subr.mxu0 0.0
  %158 = vmatpush1.msra.mxu0 0.0
  %159 = vmatprep.subr.mxu0 0.0
  %160 = vmatpush1.msra.mxu0 0.0
  %161 = vmatprep.subr.mxu0 0.0
  %162 = vmatpush1.msra.mxu0 0.0
  %163 = vmatprep.subr.mxu0 0.0
  %164 = vmatpush1.msra.mxu0 0.0
  %165 = vmatprep.subr.mxu0 0.0
  %166 = vmatpush1.msra.mxu0 0.0
  %167 = vmatprep.subr.mxu0 0.0
  %168 = vmatpush1.msra.mxu0 0.0
  %169 = vmatprep.subr.mxu0 0.0
  %170 = vmatpush1.msra.mxu0 0.0
  %171 = vmatprep.subr.mxu0 0.0
  %172 = vmatpush1.msra.mxu0 0.0
  %173 = vmatprep.subr.mxu0 0.0
  %174 = vmatpush1.msra.mxu0 0.0
  %175 = vmatprep.subr.mxu0 0.0
  %176 = vmatpush1.msra.mxu0 0.0
  %177 = vmatprep.subr.mxu0 0.0
  %178 = vmatpush1.msra.mxu0 0.0
  %179 = vmatprep.subr.mxu0 0.0
  %180 = vmatpush1.msra.mxu0 0.0
  %181 = vmatprep.subr.mxu0 0.0
  %182 = vmatpush1.msra.mxu0 0.0
  %183 = vmatprep.subr.mxu0 0.0
  %184 = vmatpush1.msra.mxu0 0.0
  %185 = vmatprep.subr.mxu0 0.0
  %186 = vmatpush1.msra.mxu0 0.0
  %187 = vmatprep.subr.mxu0 0.0
  %188 = vmatpush1.msra.mxu0 0.0
  %189 = vmatprep.subr.mxu0 0.0
  %190 = vmatpush1.msra.mxu0 0.0
  %191 = vmatprep.subr.mxu0 0.0
  %192 = vmatpush1.msra.mxu0 0.0
  %193 = vmatprep.subr.mxu0 0.0
  %194 = vmatpush1.msra.mxu0 0.0
  %195 = vmatprep.subr.mxu0 0.0
  %196 = vmatpush1.msra.mxu0 0.0
  %197 = vmatprep.subr.mxu0 0.0
  %198 = vmatpush1.msra.mxu0 0.0
  %199 = vmatprep.subr.mxu0 0.0
  %200 = vmatpush1.msra.mxu0 0.0
  %201 = vmatprep.subr.mxu0 0.0
  %202 = vmatpush1.msra.mxu0 0.0
  %203 = vmatprep.subr.mxu0 0.0
  %204 = vmatpush1.msra.mxu0 0.0
  %205 = vmatprep.subr.mxu0 0.0
  %206 = vmatpush1.msra.mxu0 0.0
  %207 = vmatprep.subr.mxu0 0.0
  %208 = vmatpush1.msra.mxu0 0.0
  %209 = vmatprep.mubr.f32.mxu0 0.0
  %210 = vmatmul.mubr.f32.gmra.mrb[0].mxu0 %v143
  %v211 = vpop.f32.mrb[0].mxu0
  %v212 = vadd.f32 %v141, %v211
  %v213 = vpop.f32.mrb[0].mxu0
  %214 = vdwg.mxu0
  %v215 = vld [vmem:[%s5] sm:$0xff]
  %v216 = vld [vmem:[%s5 + $0x8] sm:$0xff]
  %v217 = vld [vmem:[%s5 + $0x10] sm:$0xff]
  %v218 = vld [vmem:[%s5 + $0x18] sm:$0xff]
  %v220 = vsel %vm64, %v55, 0
  %222 = vmatprep.subr.mxu0 0.0
  %223 = vmatpush1.msra.mxu0 %v215
  %224 = vmatprep.subr.mxu0 0.0
  %225 = vmatpush1.msra.mxu0 %v216
  %226 = vmatprep.subr.mxu0 0.0
  %227 = vmatpush1.msra.mxu0 %v217
  %228 = vmatprep.subr.mxu0 0.0
  %229 = vmatpush1.msra.mxu0 %v218
  %230 = vmatprep.subr.mxu0 0.0
  %231 = vmatpush1.msra.mxu0 0.0
  %232 = vmatprep.subr.mxu0 0.0
  %233 = vmatpush1.msra.mxu0 0.0
  %234 = vmatprep.subr.mxu0 0.0
  %235 = vmatpush1.msra.mxu0 0.0
  %236 = vmatprep.subr.mxu0 0.0
  %237 = vmatpush1.msra.mxu0 0.0
  %238 = vmatprep.subr.mxu0 0.0
  %239 = vmatpush1.msra.mxu0 0.0
  %240 = vmatprep.subr.mxu0 0.0
  %241 = vmatpush1.msra.mxu0 0.0
  %242 = vmatprep.subr.mxu0 0.0
  %243 = vmatpush1.msra.mxu0 0.0
  %244 = vmatprep.subr.mxu0 0.0
  %245 = vmatpush1.msra.mxu0 0.0
  %246 = vmatprep.subr.mxu0 0.0
  %247 = vmatpush1.msra.mxu0 0.0
  %248 = vmatprep.subr.mxu0 0.0
  %249 = vmatpush1.msra.mxu0 0.0
  %250 = vmatprep.subr.mxu0 0.0
  %251 = vmatpush1.msra.mxu0 0.0
  %252 = vmatprep.subr.mxu0 0.0
  %253 = vmatpush1.msra.mxu0 0.0
  %254 = vmatprep.subr.mxu0 0.0
  %255 = vmatpush1.msra.mxu0 0.0
  %256 = vmatprep.subr.mxu0 0.0
  %257 = vmatpush1.msra.mxu0 0.0
  %258 = vmatprep.subr.mxu0 0.0
  %259 = vmatpush1.msra.mxu0 0.0
  %260 = vmatprep.subr.mxu0 0.0
  %261 = vmatpush1.msra.mxu0 0.0
  %262 = vmatprep.subr.mxu0 0.0
  %263 = vmatpush1.msra.mxu0 0.0
  %264 = vmatprep.subr.mxu0 0.0
  %265 = vmatpush1.msra.mxu0 0.0
  %266 = vmatprep.subr.mxu0 0.0
  %267 = vmatpush1.msra.mxu0 0.0
  %268 = vmatprep.subr.mxu0 0.0
  %269 = vmatpush1.msra.mxu0 0.0
  %270 = vmatprep.subr.mxu0 0.0
  %271 = vmatpush1.msra.mxu0 0.0
  %272 = vmatprep.subr.mxu0 0.0
  %273 = vmatpush1.msra.mxu0 0.0
  %274 = vmatprep.subr.mxu0 0.0
  %275 = vmatpush1.msra.mxu0 0.0
  %276 = vmatprep.subr.mxu0 0.0
  %277 = vmatpush1.msra.mxu0 0.0
  %278 = vmatprep.subr.mxu0 0.0
  %279 = vmatpush1.msra.mxu0 0.0
  %280 = vmatprep.subr.mxu0 0.0
  %281 = vmatpush1.msra.mxu0 0.0
  %282 = vmatprep.subr.mxu0 0.0
  %283 = vmatpush1.msra.mxu0 0.0
  %284 = vmatprep.subr.mxu0 0.0
  %285 = vmatpush1.msra.mxu0 0.0
  %286 = vmatprep.mubr.f32.mxu0 0.0
  %287 = vmatmul.mubr.f32.gmra.mrb[0].mxu0 %v220
  %v288 = vpop.f32.mrb[0].mxu0
  %v289 = vadd.f32 0.0, %v288
  %v290 = vpop.f32.mrb[0].mxu0
  %291 = vdwg.mxu0
  %v292 = vadd.f32 %v212, %v289
  %v293 = vld [vmem:[%s6] sm:$0x1]
  %v295 = vlaneseq
  %v296 = vshrl.u32 %v295, 7
  %v297 = vsub.s32 0, %v296
  %v298 = vrot.slane %v293, %v297
  %v300 = vadd.f32 %v292, %v298
  %vm301 = vcmp.gt.f32.partialorder %v300, 0.0
  %v302 = vmul.f32 %v300, 0.01
  %v303 = vsel %vm301, %v300, %v302
  %v304 = vld [vmem:[%s7] sm:$0xff]
  %v305 = vld [vmem:[%s7 + $0x8] sm:$0xff]
  %v306 = vld [vmem:[%s7 + $0x10] sm:$0xff]
  %v307 = vld [vmem:[%s7 + $0x18] sm:$0xff]
  %v308 = vld [vmem:[%s8] sm:$0x1]
  %v310 = vlaneseq
  %v311 = vshrl.u32 %v310, 7
  %v312 = vsub.s32 0, %v311
  %v313 = vrot.slane %v308, %v312
  %v316 = vsel %vm64, %v303, 0
  %318 = vmatprep.subr.mxu0 0.0
  %319 = vmatpush1.msra.mxu0 %v304
  %320 = vmatprep.subr.mxu0 0.0
  %321 = vmatpush1.msra.mxu0 %v305
  %322 = vmatprep.subr.mxu0 0.0
  %323 = vmatpush1.msra.mxu0 %v306
  %324 = vmatprep.subr.mxu0 0.0
  %325 = vmatpush1.msra.mxu0 %v307
  %326 = vmatprep.subr.mxu0 0.0
  %327 = vmatpush1.msra.mxu0 0.0
  %328 = vmatprep.subr.mxu0 0.0
  %329 = vmatpush1.msra.mxu0 0.0
  %330 = vmatprep.subr.mxu0 0.0
  %331 = vmatpush1.msra.mxu0 0.0
  %332 = vmatprep.subr.mxu0 0.0
  %333 = vmatpush1.msra.mxu0 0.0
  %334 = vmatprep.subr.mxu0 0.0
  %335 = vmatpush1.msra.mxu0 0.0
  %336 = vmatprep.subr.mxu0 0.0
  %337 = vmatpush1.msra.mxu0 0.0
  %338 = vmatprep.subr.mxu0 0.0
  %339 = vmatpush1.msra.mxu0 0.0
  %340 = vmatprep.subr.mxu0 0.0
  %341 = vmatpush1.msra.mxu0 0.0
  %342 = vmatprep.subr.mxu0 0.0
  %343 = vmatpush1.msra.mxu0 0.0
  %344 = vmatprep.subr.mxu0 0.0
  %345 = vmatpush1.msra.mxu0 0.0
  %346 = vmatprep.subr.mxu0 0.0
  %347 = vmatpush1.msra.mxu0 0.0
  %348 = vmatprep.subr.mxu0 0.0
  %349 = vmatpush1.msra.mxu0 0.0
  %350 = vmatprep.subr.mxu0 0.0
  %351 = vmatpush1.msra.mxu0 0.0
  %352 = vmatprep.subr.mxu0 0.0
  %353 = vmatpush1.msra.mxu0 0.0
  %354 = vmatprep.subr.mxu0 0.0
  %355 = vmatpush1.msra.mxu0 0.0
  %356 = vmatprep.subr.mxu0 0.0
  %357 = vmatpush1.msra.mxu0 0.0
  %358 = vmatprep.subr.mxu0 0.0
  %359 = vmatpush1.msra.mxu0 0.0
  %360 = vmatprep.subr.mxu0 0.0
  %361 = vmatpush1.msra.mxu0 0.0
  %362 = vmatprep.subr.mxu0 0.0
  %363 = vmatpush1.msra.mxu0 0.0
  %364 = vmatprep.subr.mxu0 0.0
  %365 = vmatpush1.msra.mxu0 0.0
  %366 = vmatprep.subr.mxu0 0.0
  %367 = vmatpush1.msra.mxu0 0.0
  %368 = vmatprep.subr.mxu0 0.0
  %369 = vmatpush1.msra.mxu0 0.0
  %370 = vmatprep.subr.mxu0 0.0
  %371 = vmatpush1.msra.mxu0 0.0
  %372 = vmatprep.subr.mxu0 0.0
  %373 = vmatpush1.msra.mxu0 0.0
  %374 = vmatprep.subr.mxu0 0.0
  %375 = vmatpush1.msra.mxu0 0.0
  %376 = vmatprep.subr.mxu0 0.0
  %377 = vmatpush1.msra.mxu0 0.0
  %378 = vmatprep.subr.mxu0 0.0
  %379 = vmatpush1.msra.mxu0 0.0
  %380 = vmatprep.subr.mxu0 0.0
  %381 = vmatpush1.msra.mxu0 0.0
  %382 = vmatprep.mubr.f32.mxu0 0.0
  %383 = vmatmul.mubr.f32.gmra.mrb[0].mxu0 %v316
  %v384 = vpop.f32.mrb[0].mxu0
  %v385 = vadd.f32 %v313, %v384
  %v386 = vpop.f32.mrb[0].mxu0
  %387 = vdwg.mxu0
  %vm388 = vcmp.gt.f32.partialorder %v385, 0.0
  %v389 = vmul.f32 %v385, 0.01
  %v390 = vsel %vm388, %v385, %v389
  %v391 = vld [vmem:[%s9] sm:$0xff]
  %v392 = vld [vmem:[%s9 + $0x8] sm:$0xff]
  %v393 = vld [vmem:[%s9 + $0x10] sm:$0xff]
  %v394 = vld [vmem:[%s9 + $0x18] sm:$0xff]
  %v395 = vld [vmem:[%s10] sm:$0xff]
  %v396 = vld [vmem:[%s10 + $0x8] sm:$0xff]
  %v397 = vld [vmem:[%s10 + $0x10] sm:$0xff]
  %v398 = vld [vmem:[%s10 + $0x18] sm:$0xff]
  %v400 = vsel %vm64, %v390, 0
  %402 = vmatprep.subr.mxu0 0.0
  %403 = vmatpush1.msra.mxu0 %v395
  %404 = vmatprep.subr.mxu0 0.0
  %405 = vmatpush1.msra.mxu0 %v396
  %406 = vmatprep.subr.mxu0 0.0
  %407 = vmatpush1.msra.mxu0 %v397
  %408 = vmatprep.subr.mxu0 0.0
  %409 = vmatpush1.msra.mxu0 %v398
  %410 = vmatprep.subr.mxu0 0.0
  %411 = vmatpush1.msra.mxu0 0.0
  %412 = vmatprep.subr.mxu0 0.0
  %413 = vmatpush1.msra.mxu0 0.0
  %414 = vmatprep.subr.mxu0 0.0
  %415 = vmatpush1.msra.mxu0 0.0
  %416 = vmatprep.subr.mxu0 0.0
  %417 = vmatpush1.msra.mxu0 0.0
  %418 = vmatprep.subr.mxu0 0.0
  %419 = vmatpush1.msra.mxu0 0.0
  %420 = vmatprep.subr.mxu0 0.0
  %421 = vmatpush1.msra.mxu0 0.0
  %422 = vmatprep.subr.mxu0 0.0
  %423 = vmatpush1.msra.mxu0 0.0
  %424 = vmatprep.subr.mxu0 0.0
  %425 = vmatpush1.msra.mxu0 0.0
  %426 = vmatprep.subr.mxu0 0.0
  %427 = vmatpush1.msra.mxu0 0.0
  %428 = vmatprep.subr.mxu0 0.0
  %429 = vmatpush1.msra.mxu0 0.0
  %430 = vmatprep.subr.mxu0 0.0
  %431 = vmatpush1.msra.mxu0 0.0
  %432 = vmatprep.subr.mxu0 0.0
  %433 = vmatpush1.msra.mxu0 0.0
  %434 = vmatprep.subr.mxu0 0.0
  %435 = vmatpush1.msra.mxu0 0.0
  %436 = vmatprep.subr.mxu0 0.0
  %437 = vmatpush1.msra.mxu0 0.0
  %438 = vmatprep.subr.mxu0 0.0
  %439 = vmatpush1.msra.mxu0 0.0
  %440 = vmatprep.subr.mxu0 0.0
  %441 = vmatpush1.msra.mxu0 0.0
  %442 = vmatprep.subr.mxu0 0.0
  %443 = vmatpush1.msra.mxu0 0.0
  %444 = vmatprep.subr.mxu0 0.0
  %445 = vmatpush1.msra.mxu0 0.0
  %446 = vmatprep.subr.mxu0 0.0
  %447 = vmatpush1.msra.mxu0 0.0
  %448 = vmatprep.subr.mxu0 0.0
  %449 = vmatpush1.msra.mxu0 0.0
  %450 = vmatprep.subr.mxu0 0.0
  %451 = vmatpush1.msra.mxu0 0.0
  %452 = vmatprep.subr.mxu0 0.0
  %453 = vmatpush1.msra.mxu0 0.0
  %454 = vmatprep.subr.mxu0 0.0
  %455 = vmatpush1.msra.mxu0 0.0
  %456 = vmatprep.subr.mxu0 0.0
  %457 = vmatpush1.msra.mxu0 0.0
  %458 = vmatprep.subr.mxu0 0.0
  %459 = vmatpush1.msra.mxu0 0.0
  %460 = vmatprep.subr.mxu0 0.0
  %461 = vmatpush1.msra.mxu0 0.0
  %462 = vmatprep.subr.mxu0 0.0
  %463 = vmatpush1.msra.mxu0 0.0
  %464 = vmatprep.subr.mxu0 0.0
  %465 = vmatpush1.msra.mxu0 0.0
  %466 = vmatprep.mubr.f32.mxu0 0.0
  %467 = vmatmul.mubr.f32.gmra.mrb[0].mxu0 %v400
  %v468 = vpop.f32.mrb[0].mxu0
  %v469 = vadd.f32 0.0, %v468
  %v470 = vpop.f32.mrb[0].mxu0
  %471 = vdwg.mxu0
  %472 = vmatprep.subr.mxu0 0.0
  %473 = vmatpush1.msra.mxu0 %v391
  %474 = vmatprep.subr.mxu0 0.0
  %475 = vmatpush1.msra.mxu0 %v392
  %476 = vmatprep.subr.mxu0 0.0
  %477 = vmatpush1.msra.mxu0 %v393
  %478 = vmatprep.subr.mxu0 0.0
  %479 = vmatpush1.msra.mxu0 %v394
  %480 = vmatprep.subr.mxu0 0.0
  %481 = vmatpush1.msra.mxu0 0.0
  %482 = vmatprep.subr.mxu0 0.0
  %483 = vmatpush1.msra.mxu0 0.0
  %484 = vmatprep.subr.mxu0 0.0
  %485 = vmatpush1.msra.mxu0 0.0
  %486 = vmatprep.subr.mxu0 0.0
  %487 = vmatpush1.msra.mxu0 0.0
  %488 = vmatprep.subr.mxu0 0.0
  %489 = vmatpush1.msra.mxu0 0.0
  %490 = vmatprep.subr.mxu0 0.0
  %491 = vmatpush1.msra.mxu0 0.0
  %492 = vmatprep.subr.mxu0 0.0
  %493 = vmatpush1.msra.mxu0 0.0
  %494 = vmatprep.subr.mxu0 0.0
  %495 = vmatpush1.msra.mxu0 0.0
  %496 = vmatprep.subr.mxu0 0.0
  %497 = vmatpush1.msra.mxu0 0.0
  %498 = vmatprep.subr.mxu0 0.0
  %499 = vmatpush1.msra.mxu0 0.0
  %500 = vmatprep.subr.mxu0 0.0
  %501 = vmatpush1.msra.mxu0 0.0
  %502 = vmatprep.subr.mxu0 0.0
  %503 = vmatpush1.msra.mxu0 0.0
  %504 = vmatprep.subr.mxu0 0.0
  %505 = vmatpush1.msra.mxu0 0.0
  %506 = vmatprep.subr.mxu0 0.0
  %507 = vmatpush1.msra.mxu0 0.0
  %508 = vmatprep.subr.mxu0 0.0
  %509 = vmatpush1.msra.mxu0 0.0
  %510 = vmatprep.subr.mxu0 0.0
  %511 = vmatpush1.msra.mxu0 0.0
  %512 = vmatprep.subr.mxu0 0.0
  %513 = vmatpush1.msra.mxu0 0.0
  %514 = vmatprep.subr.mxu0 0.0
  %515 = vmatpush1.msra.mxu0 0.0
  %516 = vmatprep.subr.mxu0 0.0
  %517 = vmatpush1.msra.mxu0 0.0
  %518 = vmatprep.subr.mxu0 0.0
  %519 = vmatpush1.msra.mxu0 0.0
  %520 = vmatprep.subr.mxu0 0.0
  %521 = vmatpush1.msra.mxu0 0.0
  %522 = vmatprep.subr.mxu0 0.0
  %523 = vmatpush1.msra.mxu0 0.0
  %524 = vmatprep.subr.mxu0 0.0
  %525 = vmatpush1.msra.mxu0 0.0
  %526 = vmatprep.subr.mxu0 0.0
  %527 = vmatpush1.msra.mxu0 0.0
  %528 = vmatprep.subr.mxu0 0.0
  %529 = vmatpush1.msra.mxu0 0.0
  %530 = vmatprep.subr.mxu0 0.0
  %531 = vmatpush1.msra.mxu0 0.0
  %532 = vmatprep.subr.mxu0 0.0
  %533 = vmatpush1.msra.mxu0 0.0
  %534 = vmatprep.subr.mxu0 0.0
  %535 = vmatpush1.msra.mxu0 0.0
  %536 = vmatprep.mubr.f32.mxu0 0.0
  %537 = vmatmul.mubr.f32.gmra.mrb[0].mxu0 %v316
  %v538 = vpop.f32.mrb[0].mxu0
  %v539 = vadd.f32 %v469, %v538
  %v540 = vpop.f32.mrb[0].mxu0
  %541 = vdwg.mxu0
  %v542 = vld [vmem:[%s11] sm:$0x1]
  %v544 = vlaneseq
  %v545 = vshrl.u32 %v544, 7
  %v546 = vsub.s32 0, %v545
  %v547 = vrot.slane %v542, %v546
  %v549 = vadd.f32 %v539, %v547
  %vm550 = vcmp.gt.f32.partialorder %v549, 0.0
  %v551 = vmul.f32 %v549, 0.01
  %v552 = vsel %vm550, %v549, %v551
  %v553 = vld [vmem:[%s12] sm:$0xff]
  %v554 = vld [vmem:[%s12 + $0x8] sm:$0xff]
  %v555 = vld [vmem:[%s12 + $0x10] sm:$0xff]
  %v556 = vld [vmem:[%s12 + $0x18] sm:$0xff]
  %v557 = vld [vmem:[%s13] sm:$0xff]
  %v558 = vld [vmem:[%s13 + $0x8] sm:$0xff]
  %v559 = vld [vmem:[%s13 + $0x10] sm:$0xff]
  %v560 = vld [vmem:[%s13 + $0x18] sm:$0xff]
  %561 = vmatprep.subr.mxu0 0.0
  %562 = vmatpush1.msra.mxu0 %v557
  %563 = vmatprep.subr.mxu0 0.0
  %564 = vmatpush1.msra.mxu0 %v558
  %565 = vmatprep.subr.mxu0 0.0
  %566 = vmatpush1.msra.mxu0 %v559
  %567 = vmatprep.subr.mxu0 0.0
  %568 = vmatpush1.msra.mxu0 %v560
  %569 = vmatprep.subr.mxu0 0.0
  %570 = vmatpush1.msra.mxu0 0.0
  %571 = vmatprep.subr.mxu0 0.0
  %572 = vmatpush1.msra.mxu0 0.0
  %573 = vmatprep.subr.mxu0 0.0
  %574 = vmatpush1.msra.mxu0 0.0
  %575 = vmatprep.subr.mxu0 0.0
  %576 = vmatpush1.msra.mxu0 0.0
  %577 = vmatprep.subr.mxu0 0.0
  %578 = vmatpush1.msra.mxu0 0.0
  %579 = vmatprep.subr.mxu0 0.0
  %580 = vmatpush1.msra.mxu0 0.0
  %581 = vmatprep.subr.mxu0 0.0
  %582 = vmatpush1.msra.mxu0 0.0
  %583 = vmatprep.subr.mxu0 0.0
  %584 = vmatpush1.msra.mxu0 0.0
  %585 = vmatprep.subr.mxu0 0.0
  %586 = vmatpush1.msra.mxu0 0.0
  %587 = vmatprep.subr.mxu0 0.0
  %588 = vmatpush1.msra.mxu0 0.0
  %589 = vmatprep.subr.mxu0 0.0
  %590 = vmatpush1.msra.mxu0 0.0
  %591 = vmatprep.subr.mxu0 0.0
  %592 = vmatpush1.msra.mxu0 0.0
  %593 = vmatprep.subr.mxu0 0.0
  %594 = vmatpush1.msra.mxu0 0.0
  %595 = vmatprep.subr.mxu0 0.0
  %596 = vmatpush1.msra.mxu0 0.0
  %597 = vmatprep.subr.mxu0 0.0
  %598 = vmatpush1.msra.mxu0 0.0
  %599 = vmatprep.subr.mxu0 0.0
  %600 = vmatpush1.msra.mxu0 0.0
  %601 = vmatprep.subr.mxu0 0.0
  %602 = vmatpush1.msra.mxu0 0.0
  %603 = vmatprep.subr.mxu0 0.0
  %604 = vmatpush1.msra.mxu0 0.0
  %605 = vmatprep.subr.mxu0 0.0
  %606 = vmatpush1.msra.mxu0 0.0
  %607 = vmatprep.subr.mxu0 0.0
  %608 = vmatpush1.msra.mxu0 0.0
  %609 = vmatprep.subr.mxu0 0.0
  %610 = vmatpush1.msra.mxu0 0.0
  %611 = vmatprep.subr.mxu0 0.0
  %612 = vmatpush1.msra.mxu0 0.0
  %613 = vmatprep.subr.mxu0 0.0
  %614 = vmatpush1.msra.mxu0 0.0
  %615 = vmatprep.subr.mxu0 0.0
  %616 = vmatpush1.msra.mxu0 0.0
  %617 = vmatprep.subr.mxu0 0.0
  %618 = vmatpush1.msra.mxu0 0.0
  %619 = vmatprep.subr.mxu0 0.0
  %620 = vmatpush1.msra.mxu0 0.0
  %621 = vmatprep.subr.mxu0 0.0
  %622 = vmatpush1.msra.mxu0 0.0
  %623 = vmatprep.subr.mxu0 0.0
  %624 = vmatpush1.msra.mxu0 0.0
  %625 = vmatprep.mubr.f32.mxu0 0.0
  %626 = vmatmul.mubr.f32.gmra.mrb[0].mxu0 %v400
  %v627 = vpop.f32.mrb[0].mxu0
  %v628 = vadd.f32 0.0, %v627
  %v629 = vpop.f32.mrb[0].mxu0
  %630 = vdwg.mxu0
  %631 = vmatprep.subr.mxu0 0.0
  %632 = vmatpush1.msra.mxu0 %v553
  %633 = vmatprep.subr.mxu0 0.0
  %634 = vmatpush1.msra.mxu0 %v554
  %635 = vmatprep.subr.mxu0 0.0
  %636 = vmatpush1.msra.mxu0 %v555
  %637 = vmatprep.subr.mxu0 0.0
  %638 = vmatpush1.msra.mxu0 %v556
  %639 = vmatprep.subr.mxu0 0.0
  %640 = vmatpush1.msra.mxu0 0.0
  %641 = vmatprep.subr.mxu0 0.0
  %642 = vmatpush1.msra.mxu0 0.0
  %643 = vmatprep.subr.mxu0 0.0
  %644 = vmatpush1.msra.mxu0 0.0
  %645 = vmatprep.subr.mxu0 0.0
  %646 = vmatpush1.msra.mxu0 0.0
  %647 = vmatprep.subr.mxu0 0.0
  %648 = vmatpush1.msra.mxu0 0.0
  %649 = vmatprep.subr.mxu0 0.0
  %650 = vmatpush1.msra.mxu0 0.0
  %651 = vmatprep.subr.mxu0 0.0
  %652 = vmatpush1.msra.mxu0 0.0
  %653 = vmatprep.subr.mxu0 0.0
  %654 = vmatpush1.msra.mxu0 0.0
  %655 = vmatprep.subr.mxu0 0.0
  %656 = vmatpush1.msra.mxu0 0.0
  %657 = vmatprep.subr.mxu0 0.0
  %658 = vmatpush1.msra.mxu0 0.0
  %659 = vmatprep.subr.mxu0 0.0
  %660 = vmatpush1.msra.mxu0 0.0
  %661 = vmatprep.subr.mxu0 0.0
  %662 = vmatpush1.msra.mxu0 0.0
  %663 = vmatprep.subr.mxu0 0.0
  %664 = vmatpush1.msra.mxu0 0.0
  %665 = vmatprep.subr.mxu0 0.0
  %666 = vmatpush1.msra.mxu0 0.0
  %667 = vmatprep.subr.mxu0 0.0
  %668 = vmatpush1.msra.mxu0 0.0
  %669 = vmatprep.subr.mxu0 0.0
  %670 = vmatpush1.msra.mxu0 0.0
  %671 = vmatprep.subr.mxu0 0.0
  %672 = vmatpush1.msra.mxu0 0.0
  %673 = vmatprep.subr.mxu0 0.0
  %674 = vmatpush1.msra.mxu0 0.0
  %675 = vmatprep.subr.mxu0 0.0
  %676 = vmatpush1.msra.mxu0 0.0
  %677 = vmatprep.subr.mxu0 0.0
  %678 = vmatpush1.msra.mxu0 0.0
  %679 = vmatprep.subr.mxu0 0.0
  %680 = vmatpush1.msra.mxu0 0.0
  %681 = vmatprep.subr.mxu0 0.0
  %682 = vmatpush1.msra.mxu0 0.0
  %683 = vmatprep.subr.mxu0 0.0
  %684 = vmatpush1.msra.mxu0 0.0
  %685 = vmatprep.subr.mxu0 0.0
  %686 = vmatpush1.msra.mxu0 0.0
  %687 = vmatprep.subr.mxu0 0.0
  %688 = vmatpush1.msra.mxu0 0.0
  %689 = vmatprep.subr.mxu0 0.0
  %690 = vmatpush1.msra.mxu0 0.0
  %691 = vmatprep.subr.mxu0 0.0
  %692 = vmatpush1.msra.mxu0 0.0
  %693 = vmatprep.subr.mxu0 0.0
  %694 = vmatpush1.msra.mxu0 0.0
  %695 = vmatprep.mubr.f32.mxu0 0.0
  %696 = vmatmul.mubr.f32.gmra.mrb[0].mxu0 %v316
  %v697 = vpop.f32.mrb[0].mxu0
  %v698 = vadd.f32 %v628, %v697
  %v699 = vpop.f32.mrb[0].mxu0
  %700 = vdwg.mxu0
  %v701 = vld [vmem:[%s14] sm:$0xff]
  %v702 = vld [vmem:[%s14 + $0x8] sm:$0xff]
  %v703 = vld [vmem:[%s14 + $0x10] sm:$0xff]
  %v704 = vld [vmem:[%s14 + $0x18] sm:$0xff]
  %v706 = vsel %vm64, %v552, 0
  %708 = vmatprep.subr.mxu0 0.0
  %709 = vmatpush1.msra.mxu0 %v701
  %710 = vmatprep.subr.mxu0 0.0
  %711 = vmatpush1.msra.mxu0 %v702
  %712 = vmatprep.subr.mxu0 0.0
  %713 = vmatpush1.msra.mxu0 %v703
  %714 = vmatprep.subr.mxu0 0.0
  %715 = vmatpush1.msra.mxu0 %v704
  %716 = vmatprep.subr.mxu0 0.0
  %717 = vmatpush1.msra.mxu0 0.0
  %718 = vmatprep.subr.mxu0 0.0
  %719 = vmatpush1.msra.mxu0 0.0
  %720 = vmatprep.subr.mxu0 0.0
  %721 = vmatpush1.msra.mxu0 0.0
  %722 = vmatprep.subr.mxu0 0.0
  %723 = vmatpush1.msra.mxu0 0.0
  %724 = vmatprep.subr.mxu0 0.0
  %725 = vmatpush1.msra.mxu0 0.0
  %726 = vmatprep.subr.mxu0 0.0
  %727 = vmatpush1.msra.mxu0 0.0
  %728 = vmatprep.subr.mxu0 0.0
  %729 = vmatpush1.msra.mxu0 0.0
  %730 = vmatprep.subr.mxu0 0.0
  %731 = vmatpush1.msra.mxu0 0.0
  %732 = vmatprep.subr.mxu0 0.0
  %733 = vmatpush1.msra.mxu0 0.0
  %734 = vmatprep.subr.mxu0 0.0
  %735 = vmatpush1.msra.mxu0 0.0
  %736 = vmatprep.subr.mxu0 0.0
  %737 = vmatpush1.msra.mxu0 0.0
  %738 = vmatprep.subr.mxu0 0.0
  %739 = vmatpush1.msra.mxu0 0.0
  %740 = vmatprep.subr.mxu0 0.0
  %741 = vmatpush1.msra.mxu0 0.0
  %742 = vmatprep.subr.mxu0 0.0
  %743 = vmatpush1.msra.mxu0 0.0
  %744 = vmatprep.subr.mxu0 0.0
  %745 = vmatpush1.msra.mxu0 0.0
  %746 = vmatprep.subr.mxu0 0.0
  %747 = vmatpush1.msra.mxu0 0.0
  %748 = vmatprep.subr.mxu0 0.0
  %749 = vmatpush1.msra.mxu0 0.0
  %750 = vmatprep.subr.mxu0 0.0
  %751 = vmatpush1.msra.mxu0 0.0
  %752 = vmatprep.subr.mxu0 0.0
  %753 = vmatpush1.msra.mxu0 0.0
  %754 = vmatprep.subr.mxu0 0.0
  %755 = vmatpush1.msra.mxu0 0.0
  %756 = vmatprep.subr.mxu0 0.0
  %757 = vmatpush1.msra.mxu0 0.0
  %758 = vmatprep.subr.mxu0 0.0
  %759 = vmatpush1.msra.mxu0 0.0
  %760 = vmatprep.subr.mxu0 0.0
  %761 = vmatpush1.msra.mxu0 0.0
  %762 = vmatprep.subr.mxu0 0.0
  %763 = vmatpush1.msra.mxu0 0.0
  %764 = vmatprep.subr.mxu0 0.0
  %765 = vmatpush1.msra.mxu0 0.0
  %766 = vmatprep.subr.mxu0 0.0
  %767 = vmatpush1.msra.mxu0 0.0
  %768 = vmatprep.subr.mxu0 0.0
  %769 = vmatpush1.msra.mxu0 0.0
  %770 = vmatprep.subr.mxu0 0.0
  %771 = vmatpush1.msra.mxu0 0.0
  %772 = vmatprep.mubr.f32.mxu0 0.0
  %773 = vmatmul.mubr.f32.gmra.mrb[0].mxu0 %v706
  %v774 = vpop.f32.mrb[0].mxu0
  %v775 = vadd.f32 0.0, %v774
  %v776 = vpop.f32.mrb[0].mxu0
  %777 = vdwg.mxu0
  %v778 = vadd.f32 %v698, %v775
  %v779 = vld [vmem:[%s15] sm:$0x1]
  %v781 = vlaneseq
  %v782 = vshrl.u32 %v781, 7
  %v783 = vsub.s32 0, %v782
  %v784 = vrot.slane %v779, %v783
  %v786 = vadd.f32 %v778, %v784
  %v787 = vlaneseq
  %v788 = vand.u32 %v787, 127
  %vm789 = vcmp.lt.s32.totalorder %v788, 12
  %vm790 = vcmp.ge.s32.totalorder %v788, 12
  %vm791 = vcmp.lt.s32.totalorder %v788, 32
  %vm792 = vmand %vm790, %vm791
  %v793 = vsel %vm789, %v786, -1e+30
  %794 = vmax.xlane.f32.xlu0 %v793
  %v795 = vpop.xlane.xlu0 %794
  %v796 = vsel %vm792, %v786, -1e+30
  %797 = vmax.xlane.f32.xlu0 %v796
  %v798 = vpop.xlane.xlu0 %797
  %v799 = vsub.f32 %v786, %v795
  %v800 = vsel %vm789, %v799, -1e+30
  %v801 = vmul.f32 %v800, 1.442695
  %v802 = vpow.pop %v801
  %803 = vadd.xlane.f32.xlu0 %v802
  %v804 = vpop.xlane.xlu0 %803
  %v805 = vsub.f32 %v786, %v798
  %v806 = vsel %vm792, %v805, -1e+30
  %v807 = vmul.f32 %v806, 1.442695
  %v808 = vpow.pop %v807
  %809 = vadd.xlane.f32.xlu0 %v808
  %v810 = vpop.xlane.xlu0 %809
  %v811 = vlog2.pop %v804
  %v812 = vmul.f32 %v811, 0.6931472
  %v813 = vadd.f32 %v795, %v812
  %v814 = vlog2.pop %v810
  %v815 = vmul.f32 %v814, 0.6931472
  %v816 = vadd.f32 %v798, %v815
  %v817 = vsel %vm789, %v813, %v816
  %v818 = vsub.f32 %v786, %v817
  %819 = vst [vmem:[%s16] sm:$0xff] %v818
  // Predicated region
  $region66: #{action_predictor_forward.1} parent=0 // pred_check
    _
  $region67: #{action_predictor_forward.1} parent=0 // pred_check_branch
    %821 = sbr.rel (0) target = $region69
  $region68: #{action_predictor_forward.1} parent=0 // pred_region
    _
  $region69: #{action_predictor_forward.1} parent=0 // pred_fallthru
    _
  // Predicated region
  $region70: #{action_predictor_forward.1} parent=0 // pred_check
    _
  $region71: #{action_predictor_forward.1} parent=0 // pred_check_branch
    %823 = sbr.rel (0) target = $region73
  $region72: #{action_predictor_forward.1} parent=0 // pred_region
    _
  $region73: #{action_predictor_forward.1} parent=0 // pred_fallthru
    _

</llo_original>
